<compile_context>
chip_gen: v7x
topology: tpu7x:2x2x1
jax: 0.10.0
libtpu: 0.0.40
codegen_flags: <defaults>
</compile_context>

<pallas_src>
import math
from functools import partial

import jax
import jax.numpy as jnp
from jax.experimental import pallas as pl
from jax.experimental.pallas import tpu as pltpu

MARGIN = 0.5
DOMAIN_NUM = 3  # unused in forward (kept to mirror the module __init__)

_VMEM_TILE_BUDGET = 24 * 1024 * 1024   # bytes for the double-buffered x/x_rec tiles
_MAX_TILE_ROWS = 4096
_MAX_PACK = 16


def _loss_kernel(pred_cont_ref, pred_sty_ref, y_ref, x_rec_ref, x_ref,
                 out_ref,
                 acc_abs_ref, acc_cnt_ref, ce_cont_ref, ce_sty_ref,
                 *, feat, rows_per_pack, n_packed, gpc, needs_mask):
    i = pl.program_id(0)   # core-parallel axis
    j = pl.program_id(1)   # sequential (accumulation) axis

    # ---- per-core init (every core resets its accumulators at its first step)
    @pl.when(j == 0)
    def _init():
        zero11 = jnp.zeros((1, 1), jnp.float32)
        acc_abs_ref[...] = zero11
        acc_cnt_ref[...] = zero11
        ce_cont_ref[...] = zero11
        ce_sty_ref[...] = zero11

    # ---- cross entropy: tiny, computed exactly once (core 0, first step) ----
    @pl.when((i == 0) & (j == 0))
    def _cross_entropy():
        B, C = pred_cont_ref.shape
        y = y_ref[...]                                               # (B, 1) int32
        class_ids = jax.lax.broadcasted_iota(jnp.int32, (B, C), 1)   # (B, C)
        onehot = (class_ids == y).astype(jnp.float32)

        def ce(logits_ref):
            logits = logits_ref[...].astype(jnp.float32) + 1e-6
            z = logits - jnp.max(logits, axis=-1, keepdims=True)
            lse = jnp.log(jnp.sum(jnp.exp(z), axis=-1, keepdims=True))
            nll = -jnp.sum(onehot * (z - lse), axis=-1, keepdims=True)   # (B, 1)
            return jnp.sum(nll, axis=0, keepdims=True) * (1.0 / B)       # (1, 1)

        ce_cont_ref[...] = ce(pred_cont_ref)
        ce_sty_ref[...] = ce(pred_sty_ref)

    # ---- reconstruction partial sums for this row tile ----
    x_t = x_ref[...].astype(jnp.float32)          # (T, W)
    xr_t = x_rec_ref[...].astype(jnp.float32)     # (T, W)
    T = x_t.shape[0]

    if needs_mask:
        # Zero out rows that are either Pallas boundary padding or belong to a
        # wrapped (out-of-range) logical block; they then contribute nothing
        # (and any garbage/NaN in padded reads is neutralized before |.|).
        lb = i * gpc + j                              # logical block index
        rows = lb * T + jax.lax.broadcasted_iota(jnp.int32, (T, 1), 0)
        valid = rows < n_packed                       # (T, 1) bool
        x_t = jnp.where(valid, x_t, 0.0)
        xr_t = jnp.where(valid, xr_t, 0.0)

    absdiff = jnp.abs(xr_t - x_t)                     # (T, W)

    part_abs = jnp.zeros((1, 1), jnp.float32)
    part_cnt = jnp.zeros((1, 1), jnp.float32)
    # Each packed row holds `rows_per_pack` original rows of length `feat`
    # (rows_per_pack == 1 when no packing was applied). Static unrolled loop
    # over a small constant k (<= 16).
    for c in range(rows_per_pack):
        lo, hi = c * feat, (c + 1) * feat
        row_sum = jnp.sum(x_t[:, lo:hi], axis=-1, keepdims=True)      # (T, 1)
        abs_sum = jnp.sum(absdiff[:, lo:hi], axis=-1, keepdims=True)  # (T, 1)
        m = (row_sum != 0.0).astype(jnp.float32)                      # (T, 1)
        part_abs = part_abs + jnp.sum(abs_sum * m, axis=0, keepdims=True)
        part_cnt = part_cnt + jnp.sum(m, axis=0, keepdims=True)

    acc_abs_ref[...] = acc_abs_ref[...] + part_abs
    acc_cnt_ref[...] = acc_cnt_ref[...] + part_cnt

    # ---- write this core's partial results once, lane-dense, at the end ----
    @pl.when(j == pl.num_programs(1) - 1)
    def _finalize():
        sub = jax.lax.broadcasted_iota(jnp.int32, (8, 128), 0)
        lane = jax.lax.broadcasted_iota(jnp.int32, (8, 128), 1)
        first = sub == 0
        res = jnp.zeros((8, 128), jnp.float32)
        res = jnp.where(first & (lane == 0), acc_abs_ref[...], res)
        res = jnp.where(first & (lane == 1), acc_cnt_ref[...], res)
        res = jnp.where(first & (lane == 2), ce_cont_ref[...], res)
        res = jnp.where(first & (lane == 3), ce_sty_ref[...], res)
        out_ref[...] = res


def loss_function_wostyledetection(preds, targets, margin=MARGIN, original=True,
                                   tile_rows=None):
    """preds/targets mirror the PyTorch module's argument lists."""
    stypred_cont, stypred_sty, pred_cont, pred_sty, x_rec, cont, sty = preds
    stylabels, y, x, D = targets
    del stypred_cont, stypred_sty, cont, sty, stylabels, D, original  # unused

    B, C = pred_cont.shape
    Bx, S, F = x.shape
    y2 = y.astype(jnp.int32).reshape(B, 1)

    # ---- flatten and (when possible) pack rows so the last dim is lane-dense
    N = Bx * S
    k = math.lcm(F, 128) // F
    if k > _MAX_PACK or N % k != 0:
        k = 1
    W = k * F
    n_packed = N // k
    x_p = x.reshape(n_packed, W)
    xr_p = x_rec.reshape(n_packed, W)

    # ---- tile sizing (biggest tile within the VMEM budget) ----
    itemsize = jnp.dtype(x.dtype).itemsize
    row_bytes = 2 * 2 * W * itemsize           # 2 inputs x 2 pipeline buffers
    t = max(8, (_VMEM_TILE_BUDGET // row_bytes) // 8 * 8)
    t = min(_MAX_TILE_ROWS, t)
    if tile_rows is not None:
        t = max(8, (int(tile_rows) // 8) * 8)
    if n_packed <= t:
        T, G = n_packed, 1
    else:
        T, G = t, -(-n_packed // t)

    n_cores = 2 if G >= 2 else 1               # v7x: shard sweep over both TCs
    gpc = -(-G // n_cores)                     # inner (sequential) steps per core
    needs_mask = (n_cores * gpc * T) != n_packed

    # Out-of-range logical blocks (only when G doesn't split evenly) are wrapped
    # with % G so the DMA always stays in bounds; the in-kernel validity mask
    # zeroes their contribution.
    def xmap(i, j):
        return ((i * gpc + j) % G, 0)

    kernel = partial(_loss_kernel, feat=F, rows_per_pack=k, n_packed=n_packed,
                     gpc=gpc, needs_mask=needs_mask)

    out = pl.pallas_call(
        kernel,
        out_shape=jax.ShapeDtypeStruct((n_cores * 8, 128), jnp.float32),
        grid_spec=pltpu.PrefetchScalarGridSpec(
            num_scalar_prefetch=0,
            grid=(n_cores, gpc),
            in_specs=[
                pl.BlockSpec((B, C), lambda i, j: (0, 0)),   # pred_cont (resident)
                pl.BlockSpec((B, C), lambda i, j: (0, 0)),   # pred_sty  (resident)
                pl.BlockSpec((B, 1), lambda i, j: (0, 0)),   # y         (resident)
                pl.BlockSpec((T, W), xmap),                  # x_rec (row tiles)
                pl.BlockSpec((T, W), xmap),                  # x     (row tiles)
            ],
            out_specs=pl.BlockSpec((8, 128), lambda i, j: (i, 0)),
            scratch_shapes=[pltpu.VMEM((1, 1), jnp.float32) for _ in range(4)],
        ),
        compiler_params=pltpu.CompilerParams(
            dimension_semantics=("parallel", "arbitrary"),
            vmem_limit_bytes=32 * 1024 * 1024,
        ),
    )(pred_cont, pred_sty, y2, xr_p, x_p)

    # Combine per-core partials (all non-payload entries are zero).
    vec = jnp.sum(out, axis=0)                  # (128,)
    sum_abs, cnt = vec[0], vec[1]
    clsloss_cont, clsloss_sty = vec[2], vec[3]

    # NOTE: if every (b, s) row of x sums to exactly 0, cnt == 0 and loss_rec is
    # NaN/Inf — the same degenerate behaviour as the PyTorch reference.
    loss_rec = sum_abs / (cnt * jnp.float32(F)) + jnp.float32(margin)
    loss = (clsloss_sty + clsloss_cont) * jnp.float32(0.5) + loss_rec
    zero = jnp.float32(0.0)
    return (loss, zero, zero, clsloss_cont, clsloss_sty, loss_rec)


def _reference(preds, targets, margin=MARGIN):
    """Pure-JAX reference matching the PyTorch forward."""
    _, _, pred_cont, pred_sty, x_rec, _, _ = preds
    _, y, x, _ = targets

    def ce(logits):
        logp = jax.nn.log_softmax(logits.astype(jnp.float32) + 1e-6, axis=-1)
        return -jnp.mean(jnp.take_along_axis(logp, y[:, None], axis=-1))

    clsloss_sty = ce(pred_sty)
    clsloss_cont = ce(pred_cont)
    mask = (x.sum(-1) != 0.0)
    diff = jnp.abs(x_rec - x) * mask[..., None]
    loss_rec = diff.sum() / (mask.sum() * x.shape[-1]) + margin
    loss = (clsloss_sty + clsloss_cont) * 0.5 + loss_rec
    return loss, clsloss_cont, clsloss_sty, loss_rec


def _make_case(key, B, C, S, F, keep_p=0.7):
    ks = jax.random.split(key, 6)
    pred_cont = jax.random.normal(ks[0], (B, C), jnp.float32)
    pred_sty = jax.random.normal(ks[1], (B, C), jnp.float32)
    y = jax.random.randint(ks[2], (B,), 0, C, jnp.int32)
    x = jax.random.normal(ks[3], (B, S, F), jnp.float32)
    row_keep = jax.random.bernoulli(ks[4], keep_p, (B, S)).astype(jnp.float32)
    x = x * row_keep[..., None]                 # exact zero rows for the mask
    x_rec = jax.random.normal(ks[5], (B, S, F), jnp.float32)
    dummy = jnp.zeros((1,), jnp.float32)
    preds = (dummy, dummy, pred_cont, pred_sty, x_rec, dummy, dummy)
    targets = (dummy, y, x, dummy)
    return preds, targets


if __name__ == "__main__":
    key = jax.random.PRNGKey(0)

    cases = [
        # packed rows (F=32 -> width 128), 2-core parallel axis, exact tiling
        ("packed_2core", dict(B=8, C=4, S=8, F=32), dict(tile_rows=8)),
        # no packing (F=96, N not divisible), odd G, partial last block + mask
        ("fallback_oddG", dict(B=3, C=4, S=7, F=96), dict(tile_rows=8)),
        # automatic tile sizing (single block, single core)
        ("auto_tile", dict(B=8, C=4, S=8, F=32), dict(tile_rows=None)),
    ]

    for idx, (name, shp, kw) in enumerate(cases):
        preds, targets = _make_case(jax.random.fold_in(key, idx), **shp)
        outs = loss_function_wostyledetection(preds, targets, margin=MARGIN, **kw)
        outs = jax.block_until_ready(outs)
        loss, _, _, clsc, clss, rec = outs

        ref_loss, ref_clsc, ref_clss, ref_rec = _reference(preds, targets, MARGIN)
        for got, want in [(loss, ref_loss), (clsc, ref_clsc),
                          (clss, ref_clss), (rec, ref_rec)]:
            assert jnp.allclose(got, want, atol=1e-4, rtol=1e-4), \
                (name, float(got), float(want))

    print("KERNEL_OK")
</pallas_src>

<mosaic_0001>
module attributes {stable_mosaic.version = 11 : i64} {
  func.func @_loss_kernel(%arg0: i32, %arg1: i32, %arg2: memref<8x4xf32, #tpu.memory_space<vmem>>, %arg3: memref<8x4xf32, #tpu.memory_space<vmem>>, %arg4: memref<8x1xi32, #tpu.memory_space<vmem>>, %arg5: memref<8x128xf32, #tpu.memory_space<vmem>>, %arg6: memref<8x128xf32, #tpu.memory_space<vmem>>, %arg7: memref<8x128xf32, #tpu.memory_space<vmem>>, %arg8: memref<1x1xf32, #tpu.memory_space<vmem>>, %arg9: memref<1x1xf32, #tpu.memory_space<vmem>>, %arg10: memref<1x1xf32, #tpu.memory_space<vmem>>, %arg11: memref<1x1xf32, #tpu.memory_space<vmem>>) attributes {dimension_semantics = [#tpu.dimension_semantics<parallel>, #tpu.dimension_semantics<arbitrary>], iteration_bounds = array<i64: 2, 1>, scalar_prefetch = 0 : i64, scratch_operands = 4 : i64, tpu.core_type = #tpu.core_type<tc>, window_params = [{pipeline_mode = #tpu.pipeline_mode<synchronous>, transform_indices = @transform_0, window_bounds = array<i64: 8, 4>}, {pipeline_mode = #tpu.pipeline_mode<synchronous>, transform_indices = @transform_1, window_bounds = array<i64: 8, 4>}, {pipeline_mode = #tpu.pipeline_mode<synchronous>, transform_indices = @transform_2, window_bounds = array<i64: 8, 1>}, {transform_indices = @transform_3, window_bounds = array<i64: 8, 128>}, {transform_indices = @transform_4, window_bounds = array<i64: 8, 128>}, {transform_indices = @transform_5, window_bounds = array<i64: 8, 128>}]} {
    %c0_i32 = arith.constant 0 : i32
    %0 = arith.cmpi eq, %arg1, %c0_i32 : i32
    %1 = arith.extui %0 : i1 to i32
    %c0_i32_0 = arith.constant 0 : i32
    %2 = arith.cmpi ne, %1, %c0_i32_0 : i32
    scf.if %2 {
      %cst_38 = arith.constant 0.000000e+00 : f32
      %91 = vector.broadcast %cst_38 : f32 to vector<1x1xf32>
      %c0_39 = arith.constant 0 : index
      %c0_40 = arith.constant 0 : index
      %92 = vector.load %arg8[%c0_39, %c0_40] : memref<1x1xf32, #tpu.memory_space<vmem>>, vector<1x1xf32>
      tpu.vector_store %arg8[%c0_39, %c0_40], %91 {strides = array<i32>} : memref<1x1xf32, #tpu.memory_space<vmem>>, vector<1x1xf32>,
      %c0_41 = arith.constant 0 : index
      %c0_42 = arith.constant 0 : index
      %93 = vector.load %arg9[%c0_41, %c0_42] : memref<1x1xf32, #tpu.memory_space<vmem>>, vector<1x1xf32>
      tpu.vector_store %arg9[%c0_41, %c0_42], %91 {strides = array<i32>} : memref<1x1xf32, #tpu.memory_space<vmem>>, vector<1x1xf32>,
      %c0_43 = arith.constant 0 : index
      %c0_44 = arith.constant 0 : index
      %94 = vector.load %arg10[%c0_43, %c0_44] : memref<1x1xf32, #tpu.memory_space<vmem>>, vector<1x1xf32>
      tpu.vector_store %arg10[%c0_43, %c0_44], %91 {strides = array<i32>} : memref<1x1xf32, #tpu.memory_space<vmem>>, vector<1x1xf32>,
      %c0_45 = arith.constant 0 : index
      %c0_46 = arith.constant 0 : index
      %95 = vector.load %arg11[%c0_45, %c0_46] : memref<1x1xf32, #tpu.memory_space<vmem>>, vector<1x1xf32>
      tpu.vector_store %arg11[%c0_45, %c0_46], %91 {strides = array<i32>} : memref<1x1xf32, #tpu.memory_space<vmem>>, vector<1x1xf32>,
    } else {
    }
    %c0_i32_1 = arith.constant 0 : i32
    %3 = arith.cmpi eq, %arg0, %c0_i32_1 : i32
    %c0_i32_2 = arith.constant 0 : i32
    %4 = arith.cmpi eq, %arg1, %c0_i32_2 : i32
    %5 = arith.andi %3, %4 : i1
    %6 = arith.extui %5 : i1 to i32
    %c0_i32_3 = arith.constant 0 : i32
    %7 = arith.cmpi ne, %6, %c0_i32_3 : i32
    scf.if %7 {
      %c0_38 = arith.constant 0 : index
      %c0_39 = arith.constant 0 : index
      %91 = vector.load %arg4[%c0_38, %c0_39] : memref<8x1xi32, #tpu.memory_space<vmem>>, vector<8x1xi32>
      %92 = tpu.iota {dimensions = array<i32: 1>} : vector<8x4xi32>
      %93 = vector.broadcast %91 : vector<8x1xi32> to vector<8x4xi32>
      %94 = arith.cmpi eq, %92, %93 : vector<8x4xi32>
      %95 = arith.extui %94 : vector<8x4xi1> to vector<8x4xi32>
      %96 = arith.sitofp %95 : vector<8x4xi32> to vector<8x4xf32>
      %c0_40 = arith.constant 0 : index
      %c0_41 = arith.constant 0 : index
      %97 = vector.load %arg2[%c0_40, %c0_41] : memref<8x4xf32, #tpu.memory_space<vmem>>, vector<8x4xf32>
      %cst_42 = arith.constant 9.99999997E-7 : f32
      %98 = vector.broadcast %cst_42 : f32 to vector<8x4xf32>
      %99 = arith.addf %97, %98 : vector<8x4xf32>
      %cst_43 = arith.constant dense<0xFF800000> : vector<8xf32>
      %100 = vector.multi_reduction <maximumf>, %99, %cst_43 [1] : vector<8x4xf32> to vector<8xf32>
      %101 = vector.shape_cast %100 : vector<8xf32> to vector<8x1xf32>
      %102 = vector.broadcast %101 : vector<8x1xf32> to vector<8x4xf32>
      %103 = arith.subf %99, %102 : vector<8x4xf32>
      %104 = math.exp %103 : vector<8x4xf32>
      %cst_44 = arith.constant dense<0.000000e+00> : vector<8xf32>
      %105 = vector.multi_reduction <add>, %104, %cst_44 [1] : vector<8x4xf32> to vector<8xf32>
      %106 = vector.shape_cast %105 : vector<8xf32> to vector<8x1xf32>
      %107 = math.log %106 : vector<8x1xf32>
      %108 = vector.broadcast %107 : vector<8x1xf32> to vector<8x4xf32>
      %109 = arith.subf %103, %108 : vector<8x4xf32>
      %110 = arith.mulf %96, %109 : vector<8x4xf32>
      %cst_45 = arith.constant dense<0.000000e+00> : vector<8xf32>
      %111 = vector.multi_reduction <add>, %110, %cst_45 [1] : vector<8x4xf32> to vector<8xf32>
      %112 = vector.shape_cast %111 : vector<8xf32> to vector<8x1xf32>
      %cst_46 = arith.constant 0.000000e+00 : f32
      %113 = vector.broadcast %cst_46 : f32 to vector<8x1xf32>
      %114 = arith.subf %113, %112 : vector<8x1xf32>
      %cst_47 = arith.constant dense<0.000000e+00> : vector<1xf32>
      %115 = vector.multi_reduction <add>, %114, %cst_47 [0] : vector<8x1xf32> to vector<1xf32>
      %116 = vector.shape_cast %115 : vector<1xf32> to vector<1x1xf32>
      %cst_48 = arith.constant 1.250000e-01 : f32
      %117 = vector.broadcast %cst_48 : f32 to vector<1x1xf32>
      %118 = arith.mulf %116, %117 : vector<1x1xf32>
      %c0_49 = arith.constant 0 : index
      %c0_50 = arith.constant 0 : index
      %119 = vector.load %arg10[%c0_49, %c0_50] : memref<1x1xf32, #tpu.memory_space<vmem>>, vector<1x1xf32>
      tpu.vector_store %arg10[%c0_49, %c0_50], %118 {strides = array<i32>} : memref<1x1xf32, #tpu.memory_space<vmem>>, vector<1x1xf32>,
      %c0_51 = arith.constant 0 : index
      %c0_52 = arith.constant 0 : index
      %120 = vector.load %arg3[%c0_51, %c0_52] : memref<8x4xf32, #tpu.memory_space<vmem>>, vector<8x4xf32>
      %cst_53 = arith.constant 9.99999997E-7 : f32
      %121 = vector.broadcast %cst_53 : f32 to vector<8x4xf32>
      %122 = arith.addf %120, %121 : vector<8x4xf32>
      %cst_54 = arith.constant dense<0xFF800000> : vector<8xf32>
      %123 = vector.multi_reduction <maximumf>, %122, %cst_54 [1] : vector<8x4xf32> to vector<8xf32>
      %124 = vector.shape_cast %123 : vector<8xf32> to vector<8x1xf32>
      %125 = vector.broadcast %124 : vector<8x1xf32> to vector<8x4xf32>
      %126 = arith.subf %122, %125 : vector<8x4xf32>
      %127 = math.exp %126 : vector<8x4xf32>
      %cst_55 = arith.constant dense<0.000000e+00> : vector<8xf32>
      %128 = vector.multi_reduction <add>, %127, %cst_55 [1] : vector<8x4xf32> to vector<8xf32>
      %129 = vector.shape_cast %128 : vector<8xf32> to vector<8x1xf32>
      %130 = math.log %129 : vector<8x1xf32>
      %131 = vector.broadcast %130 : vector<8x1xf32> to vector<8x4xf32>
      %132 = arith.subf %126, %131 : vector<8x4xf32>
      %133 = arith.mulf %96, %132 : vector<8x4xf32>
      %cst_56 = arith.constant dense<0.000000e+00> : vector<8xf32>
      %134 = vector.multi_reduction <add>, %133, %cst_56 [1] : vector<8x4xf32> to vector<8xf32>
      %135 = vector.shape_cast %134 : vector<8xf32> to vector<8x1xf32>
      %cst_57 = arith.constant 0.000000e+00 : f32
      %136 = vector.broadcast %cst_57 : f32 to vector<8x1xf32>
      %137 = arith.subf %136, %135 : vector<8x1xf32>
      %cst_58 = arith.constant dense<0.000000e+00> : vector<1xf32>
      %138 = vector.multi_reduction <add>, %137, %cst_58 [0] : vector<8x1xf32> to vector<1xf32>
      %139 = vector.shape_cast %138 : vector<1xf32> to vector<1x1xf32>
      %cst_59 = arith.constant 1.250000e-01 : f32
      %140 = vector.broadcast %cst_59 : f32 to vector<1x1xf32>
      %141 = arith.mulf %139, %140 : vector<1x1xf32>
      %c0_60 = arith.constant 0 : index
      %c0_61 = arith.constant 0 : index
      %142 = vector.load %arg11[%c0_60, %c0_61] : memref<1x1xf32, #tpu.memory_space<vmem>>, vector<1x1xf32>
      tpu.vector_store %arg11[%c0_60, %c0_61], %141 {strides = array<i32>} : memref<1x1xf32, #tpu.memory_space<vmem>>, vector<1x1xf32>,
    } else {
    }
    %c0 = arith.constant 0 : index
    %c0_4 = arith.constant 0 : index
    %8 = vector.load %arg6[%c0, %c0_4] : memref<8x128xf32, #tpu.memory_space<vmem>>, vector<8x128xf32>
    %c0_5 = arith.constant 0 : index
    %c0_6 = arith.constant 0 : index
    %9 = vector.load %arg5[%c0_5, %c0_6] : memref<8x128xf32, #tpu.memory_space<vmem>>, vector<8x128xf32>
    %10 = arith.subf %9, %8 : vector<8x128xf32>
    %11 = math.absf %10 : vector<8x128xf32>
    %cst = arith.constant 0.000000e+00 : f32
    %12 = vector.broadcast %cst : f32 to vector<1x1xf32>
    %cst_7 = arith.constant 0.000000e+00 : f32
    %13 = vector.broadcast %cst_7 : f32 to vector<1x1xf32>
    %14 = vector.extract_strided_slice %8 {offsets = [0, 0], sizes = [8, 32], strides = [1, 1]} : vector<8x128xf32> to vector<8x32xf32>
    %cst_8 = arith.constant dense<0.000000e+00> : vector<8xf32>
    %15 = vector.multi_reduction <add>, %14, %cst_8 [1] : vector<8x32xf32> to vector<8xf32>
    %16 = vector.shape_cast %15 : vector<8xf32> to vector<8x1xf32>
    %17 = vector.extract_strided_slice %11 {offsets = [0, 0], sizes = [8, 32], strides = [1, 1]} : vector<8x128xf32> to vector<8x32xf32>
    %cst_9 = arith.constant dense<0.000000e+00> : vector<8xf32>
    %18 = vector.multi_reduction <add>, %17, %cst_9 [1] : vector<8x32xf32> to vector<8xf32>
    %19 = vector.shape_cast %18 : vector<8xf32> to vector<8x1xf32>
    %cst_10 = arith.constant 0.000000e+00 : f32
    %20 = vector.broadcast %cst_10 : f32 to vector<8x1xf32>
    %21 = arith.cmpf one, %16, %20 : vector<8x1xf32>
    %22 = arith.extui %21 : vector<8x1xi1> to vector<8x1xi32>
    %23 = arith.sitofp %22 : vector<8x1xi32> to vector<8x1xf32>
    %24 = arith.mulf %19, %23 : vector<8x1xf32>
    %cst_11 = arith.constant dense<0.000000e+00> : vector<1xf32>
    %25 = vector.multi_reduction <add>, %24, %cst_11 [0] : vector<8x1xf32> to vector<1xf32>
    %26 = vector.shape_cast %25 : vector<1xf32> to vector<1x1xf32>
    %27 = arith.addf %12, %26 : vector<1x1xf32>
    %cst_12 = arith.constant dense<0.000000e+00> : vector<1xf32>
    %28 = vector.multi_reduction <add>, %23, %cst_12 [0] : vector<8x1xf32> to vector<1xf32>
    %29 = vector.shape_cast %28 : vector<1xf32> to vector<1x1xf32>
    %30 = arith.addf %13, %29 : vector<1x1xf32>
    %31 = vector.extract_strided_slice %8 {offsets = [0, 32], sizes = [8, 32], strides = [1, 1]} : vector<8x128xf32> to vector<8x32xf32>
    %cst_13 = arith.constant dense<0.000000e+00> : vector<8xf32>
    %32 = vector.multi_reduction <add>, %31, %cst_13 [1] : vector<8x32xf32> to vector<8xf32>
    %33 = vector.shape_cast %32 : vector<8xf32> to vector<8x1xf32>
    %34 = vector.extract_strided_slice %11 {offsets = [0, 32], sizes = [8, 32], strides = [1, 1]} : vector<8x128xf32> to vector<8x32xf32>
    %cst_14 = arith.constant dense<0.000000e+00> : vector<8xf32>
    %35 = vector.multi_reduction <add>, %34, %cst_14 [1] : vector<8x32xf32> to vector<8xf32>
    %36 = vector.shape_cast %35 : vector<8xf32> to vector<8x1xf32>
    %cst_15 = arith.constant 0.000000e+00 : f32
    %37 = vector.broadcast %cst_15 : f32 to vector<8x1xf32>
    %38 = arith.cmpf one, %33, %37 : vector<8x1xf32>
    %39 = arith.extui %38 : vector<8x1xi1> to vector<8x1xi32>
    %40 = arith.sitofp %39 : vector<8x1xi32> to vector<8x1xf32>
    %41 = arith.mulf %36, %40 : vector<8x1xf32>
    %cst_16 = arith.constant dense<0.000000e+00> : vector<1xf32>
    %42 = vector.multi_reduction <add>, %41, %cst_16 [0] : vector<8x1xf32> to vector<1xf32>
    %43 = vector.shape_cast %42 : vector<1xf32> to vector<1x1xf32>
    %44 = arith.addf %27, %43 : vector<1x1xf32>
    %cst_17 = arith.constant dense<0.000000e+00> : vector<1xf32>
    %45 = vector.multi_reduction <add>, %40, %cst_17 [0] : vector<8x1xf32> to vector<1xf32>
    %46 = vector.shape_cast %45 : vector<1xf32> to vector<1x1xf32>
    %47 = arith.addf %30, %46 : vector<1x1xf32>
    %48 = vector.extract_strided_slice %8 {offsets = [0, 64], sizes = [8, 32], strides = [1, 1]} : vector<8x128xf32> to vector<8x32xf32>
    %cst_18 = arith.constant dense<0.000000e+00> : vector<8xf32>
    %49 = vector.multi_reduction <add>, %48, %cst_18 [1] : vector<8x32xf32> to vector<8xf32>
    %50 = vector.shape_cast %49 : vector<8xf32> to vector<8x1xf32>
    %51 = vector.extract_strided_slice %11 {offsets = [0, 64], sizes = [8, 32], strides = [1, 1]} : vector<8x128xf32> to vector<8x32xf32>
    %cst_19 = arith.constant dense<0.000000e+00> : vector<8xf32>
    %52 = vector.multi_reduction <add>, %51, %cst_19 [1] : vector<8x32xf32> to vector<8xf32>
    %53 = vector.shape_cast %52 : vector<8xf32> to vector<8x1xf32>
    %cst_20 = arith.constant 0.000000e+00 : f32
    %54 = vector.broadcast %cst_20 : f32 to vector<8x1xf32>
    %55 = arith.cmpf one, %50, %54 : vector<8x1xf32>
    %56 = arith.extui %55 : vector<8x1xi1> to vector<8x1xi32>
    %57 = arith.sitofp %56 : vector<8x1xi32> to vector<8x1xf32>
    %58 = arith.mulf %53, %57 : vector<8x1xf32>
    %cst_21 = arith.constant dense<0.000000e+00> : vector<1xf32>
    %59 = vector.multi_reduction <add>, %58, %cst_21 [0] : vector<8x1xf32> to vector<1xf32>
    %60 = vector.shape_cast %59 : vector<1xf32> to vector<1x1xf32>
    %61 = arith.addf %44, %60 : vector<1x1xf32>
    %cst_22 = arith.constant dense<0.000000e+00> : vector<1xf32>
    %62 = vector.multi_reduction <add>, %57, %cst_22 [0] : vector<8x1xf32> to vector<1xf32>
    %63 = vector.shape_cast %62 : vector<1xf32> to vector<1x1xf32>
    %64 = arith.addf %47, %63 : vector<1x1xf32>
    %65 = vector.extract_strided_slice %8 {offsets = [0, 96], sizes = [8, 32], strides = [1, 1]} : vector<8x128xf32> to vector<8x32xf32>
    %cst_23 = arith.constant dense<0.000000e+00> : vector<8xf32>
    %66 = vector.multi_reduction <add>, %65, %cst_23 [1] : vector<8x32xf32> to vector<8xf32>
    %67 = vector.shape_cast %66 : vector<8xf32> to vector<8x1xf32>
    %68 = vector.extract_strided_slice %11 {offsets = [0, 96], sizes = [8, 32], strides = [1, 1]} : vector<8x128xf32> to vector<8x32xf32>
    %cst_24 = arith.constant dense<0.000000e+00> : vector<8xf32>
    %69 = vector.multi_reduction <add>, %68, %cst_24 [1] : vector<8x32xf32> to vector<8xf32>
    %70 = vector.shape_cast %69 : vector<8xf32> to vector<8x1xf32>
    %cst_25 = arith.constant 0.000000e+00 : f32
    %71 = vector.broadcast %cst_25 : f32 to vector<8x1xf32>
    %72 = arith.cmpf one, %67, %71 : vector<8x1xf32>
    %73 = arith.extui %72 : vector<8x1xi1> to vector<8x1xi32>
    %74 = arith.sitofp %73 : vector<8x1xi32> to vector<8x1xf32>
    %75 = arith.mulf %70, %74 : vector<8x1xf32>
    %cst_26 = arith.constant dense<0.000000e+00> : vector<1xf32>
    %76 = vector.multi_reduction <add>, %75, %cst_26 [0] : vector<8x1xf32> to vector<1xf32>
    %77 = vector.shape_cast %76 : vector<1xf32> to vector<1x1xf32>
    %78 = arith.addf %61, %77 : vector<1x1xf32>
    %cst_27 = arith.constant dense<0.000000e+00> : vector<1xf32>
    %79 = vector.multi_reduction <add>, %74, %cst_27 [0] : vector<8x1xf32> to vector<1xf32>
    %80 = vector.shape_cast %79 : vector<1xf32> to vector<1x1xf32>
    %81 = arith.addf %64, %80 : vector<1x1xf32>
    %c0_28 = arith.constant 0 : index
    %c0_29 = arith.constant 0 : index
    %82 = vector.load %arg8[%c0_28, %c0_29] : memref<1x1xf32, #tpu.memory_space<vmem>>, vector<1x1xf32>
    %83 = arith.addf %82, %78 : vector<1x1xf32>
    %c0_30 = arith.constant 0 : index
    %c0_31 = arith.constant 0 : index
    %84 = vector.load %arg8[%c0_30, %c0_31] : memref<1x1xf32, #tpu.memory_space<vmem>>, vector<1x1xf32>
    tpu.vector_store %arg8[%c0_30, %c0_31], %83 {strides = array<i32>} : memref<1x1xf32, #tpu.memory_space<vmem>>, vector<1x1xf32>,
    %c0_32 = arith.constant 0 : index
    %c0_33 = arith.constant 0 : index
    %85 = vector.load %arg9[%c0_32, %c0_33] : memref<1x1xf32, #tpu.memory_space<vmem>>, vector<1x1xf32>
    %86 = arith.addf %85, %81 : vector<1x1xf32>
    %c0_34 = arith.constant 0 : index
    %c0_35 = arith.constant 0 : index
    %87 = vector.load %arg9[%c0_34, %c0_35] : memref<1x1xf32, #tpu.memory_space<vmem>>, vector<1x1xf32>
    tpu.vector_store %arg9[%c0_34, %c0_35], %86 {strides = array<i32>} : memref<1x1xf32, #tpu.memory_space<vmem>>, vector<1x1xf32>,
    %c0_i32_36 = arith.constant 0 : i32
    %88 = arith.cmpi eq, %arg1, %c0_i32_36 : i32
    %89 = arith.extui %88 : i1 to i32
    %c0_i32_37 = arith.constant 0 : i32
    %90 = arith.cmpi ne, %89, %c0_i32_37 : i32
    scf.if %90 {
      %91 = tpu.iota {dimensions = array<i32: 0>} : vector<8x128xi32>
      %92 = tpu.iota {dimensions = array<i32: 1>} : vector<8x128xi32>
      %c0_i32_38 = arith.constant 0 : i32
      %93 = vector.broadcast %c0_i32_38 : i32 to vector<8x128xi32>
      %94 = arith.cmpi eq, %91, %93 : vector<8x128xi32>
      %cst_39 = arith.constant 0.000000e+00 : f32
      %95 = vector.broadcast %cst_39 : f32 to vector<8x128xf32>
      %c0_i32_40 = arith.constant 0 : i32
      %96 = vector.broadcast %c0_i32_40 : i32 to vector<8x128xi32>
      %97 = arith.cmpi eq, %92, %96 : vector<8x128xi32>
      %98 = arith.andi %94, %97 : vector<8x128xi1>
      %c0_41 = arith.constant 0 : index
      %c0_42 = arith.constant 0 : index
      %99 = vector.load %arg8[%c0_41, %c0_42] : memref<1x1xf32, #tpu.memory_space<vmem>>, vector<1x1xf32>
      %100 = vector.shape_cast %99 : vector<1x1xf32> to vector<1x1xf32>
      %101 = vector.broadcast %100 : vector<1x1xf32> to vector<8x128xf32>
      %102 = arith.select %98, %101, %95 : vector<8x128xi1>, vector<8x128xf32>
      %c1_i32 = arith.constant 1 : i32
      %103 = vector.broadcast %c1_i32 : i32 to vector<8x128xi32>
      %104 = arith.cmpi eq, %92, %103 : vector<8x128xi32>
      %105 = arith.andi %94, %104 : vector<8x128xi1>
      %c0_43 = arith.constant 0 : index
      %c0_44 = arith.constant 0 : index
      %106 = vector.load %arg9[%c0_43, %c0_44] : memref<1x1xf32, #tpu.memory_space<vmem>>, vector<1x1xf32>
      %107 = vector.shape_cast %106 : vector<1x1xf32> to vector<1x1xf32>
      %108 = vector.broadcast %107 : vector<1x1xf32> to vector<8x128xf32>
      %109 = arith.select %105, %108, %102 : vector<8x128xi1>, vector<8x128xf32>
      %c2_i32 = arith.constant 2 : i32
      %110 = vector.broadcast %c2_i32 : i32 to vector<8x128xi32>
      %111 = arith.cmpi eq, %92, %110 : vector<8x128xi32>
      %112 = arith.andi %94, %111 : vector<8x128xi1>
      %c0_45 = arith.constant 0 : index
      %c0_46 = arith.constant 0 : index
      %113 = vector.load %arg10[%c0_45, %c0_46] : memref<1x1xf32, #tpu.memory_space<vmem>>, vector<1x1xf32>
      %114 = vector.shape_cast %113 : vector<1x1xf32> to vector<1x1xf32>
      %115 = vector.broadcast %114 : vector<1x1xf32> to vector<8x128xf32>
      %116 = arith.select %112, %115, %109 : vector<8x128xi1>, vector<8x128xf32>
      %c3_i32 = arith.constant 3 : i32
      %117 = vector.broadcast %c3_i32 : i32 to vector<8x128xi32>
      %118 = arith.cmpi eq, %92, %117 : vector<8x128xi32>
      %119 = arith.andi %94, %118 : vector<8x128xi1>
      %c0_47 = arith.constant 0 : index
      %c0_48 = arith.constant 0 : index
      %120 = vector.load %arg11[%c0_47, %c0_48] : memref<1x1xf32, #tpu.memory_space<vmem>>, vector<1x1xf32>
      %121 = vector.shape_cast %120 : vector<1x1xf32> to vector<1x1xf32>
      %122 = vector.broadcast %121 : vector<1x1xf32> to vector<8x128xf32>
      %123 = arith.select %119, %122, %116 : vector<8x128xi1>, vector<8x128xf32>
      %c0_49 = arith.constant 0 : index
      %c0_50 = arith.constant 0 : index
      %124 = vector.load %arg7[%c0_49, %c0_50] : memref<8x128xf32, #tpu.memory_space<vmem>>, vector<8x128xf32>
      tpu.vector_store %arg7[%c0_49, %c0_50], %123 {strides = array<i32>} : memref<8x128xf32, #tpu.memory_space<vmem>>, vector<8x128xf32>,
    } else {
    }
    return
  }
  func.func @transform_0(%arg0: i32, %arg1: i32) -> (i32, i32) {
    %c0_i32 = arith.constant 0 : i32
    %c0_i32_0 = arith.constant 0 : i32
    %c0_i32_1 = arith.constant 0 : i32
    return %c0_i32, %c0_i32_0 : i32, i32
  }
  func.func @transform_1(%arg0: i32, %arg1: i32) -> (i32, i32) {
    %c0_i32 = arith.constant 0 : i32
    %c0_i32_0 = arith.constant 0 : i32
    %c0_i32_1 = arith.constant 0 : i32
    return %c0_i32, %c0_i32_0 : i32, i32
  }
  func.func @transform_2(%arg0: i32, %arg1: i32) -> (i32, i32) {
    %c0_i32 = arith.constant 0 : i32
    %c0_i32_0 = arith.constant 0 : i32
    %c0_i32_1 = arith.constant 0 : i32
    return %c0_i32, %c0_i32_0 : i32, i32
  }
  func.func @transform_3(%arg0: i32, %arg1: i32) -> (i32, i32) {
    %c1_i32 = arith.constant 1 : i32
    %0 = arith.muli %arg0, %c1_i32 : i32
    %1 = arith.addi %0, %arg1 : i32
    %c2_i32 = arith.constant 2 : i32
    %c0_i32 = arith.constant 0 : i32
    %2 = arith.cmpi eq, %c2_i32, %c0_i32 : i32
    %c1_i32_0 = arith.constant 1 : i32
    %3 = arith.select %2, %c1_i32_0, %c2_i32 : i32
    %4 = arith.remsi %1, %3 : i32
    %c0_i32_1 = arith.constant 0 : i32
    %5 = arith.cmpi ne, %4, %c0_i32_1 : i32
    %c0_i32_2 = arith.constant 0 : i32
    %6 = arith.cmpi slt, %4, %c0_i32_2 : i32
    %c0_i32_3 = arith.constant 0 : i32
    %7 = arith.cmpi slt, %3, %c0_i32_3 : i32
    %8 = arith.xori %6, %7 : i1
    %9 = arith.andi %8, %5 : i1
    %10 = arith.addi %4, %3 : i32
    %11 = arith.select %9, %10, %4 : i32
    %c0_i32_4 = arith.constant 0 : i32
    %c0_i32_5 = arith.constant 0 : i32
    return %11, %c0_i32_4 : i32, i32
  }
  func.func @transform_4(%arg0: i32, %arg1: i32) -> (i32, i32) {
    %c1_i32 = arith.constant 1 : i32
    %0 = arith.muli %arg0, %c1_i32 : i32
    %1 = arith.addi %0, %arg1 : i32
    %c2_i32 = arith.constant 2 : i32
    %c0_i32 = arith.constant 0 : i32
    %2 = arith.cmpi eq, %c2_i32, %c0_i32 : i32
    %c1_i32_0 = arith.constant 1 : i32
    %3 = arith.select %2, %c1_i32_0, %c2_i32 : i32
    %4 = arith.remsi %1, %3 : i32
    %c0_i32_1 = arith.constant 0 : i32
    %5 = arith.cmpi ne, %4, %c0_i32_1 : i32
    %c0_i32_2 = arith.constant 0 : i32
    %6 = arith.cmpi slt, %4, %c0_i32_2 : i32
    %c0_i32_3 = arith.constant 0 : i32
    %7 = arith.cmpi slt, %3, %c0_i32_3 : i32
    %8 = arith.xori %6, %7 : i1
    %9 = arith.andi %8, %5 : i1
    %10 = arith.addi %4, %3 : i32
    %11 = arith.select %9, %10, %4 : i32
    %c0_i32_4 = arith.constant 0 : i32
    %c0_i32_5 = arith.constant 0 : i32
    return %11, %c0_i32_4 : i32, i32
  }
  func.func @transform_5(%arg0: i32, %arg1: i32) -> (i32, i32) {
    %c0_i32 = arith.constant 0 : i32
    %c0_i32_0 = arith.constant 0 : i32
    return %arg0, %c0_i32 : i32, i32
  }
}

</mosaic_0001>

<llo_original>
// kernel: tpu_custom_call.1
$region0: #{tpu_custom_call.1}
  #allocation0 [shape = 'u32[]', space=smem, size = 0x4, offset = 0x4, fixed_abs, tag = 'smem constant byte address 0x4 - core index']
  #allocation1 [shape = 'u32[144,128]{1,0:T(1,128)}', space=vmem, size = 0x12000, scoped, tag = 'internal scratch']
  #allocation2 [shape = 'f32[1,1]{1,0:T(1,128)}', space=vmem, size = 0x200, scoped, tag = 'scratch operand']
  #allocation3 [shape = 'f32[1,1]{1,0:T(1,128)}', space=vmem, size = 0x200, scoped, tag = 'scratch operand']
  #allocation4 [shape = 'f32[1,1]{1,0:T(1,128)}', space=vmem, size = 0x200, scoped, tag = 'scratch operand']
  #allocation5 [shape = 'f32[1,1]{1,0:T(1,128)}', space=vmem, size = 0x200, scoped, tag = 'scratch operand']
  %s0 = inlined_call_operand.vmem [shape: f32[8,4], index: 0, kind: input, shape index: {}]
  %s1 = inlined_call_operand.vmem [shape: f32[8,4], index: 1, kind: input, shape index: {}]
  %s2 = inlined_call_operand.vmem [shape: s32[8,1], index: 2, kind: input, shape index: {}]
  %s3 = inlined_call_operand.vmem [shape: f32[16,128], index: 3, kind: input, shape index: {}]
  %s4 = inlined_call_operand.vmem [shape: f32[16,128], index: 4, kind: input, shape index: {}]
  %s5 = inlined_call_operand.hbm [shape: f32[16,128], index: 5, kind: output, shape index: {}]
  %s6 = sld [smem:[#allocation0]]
  $region65: #{tpu_custom_call.1} parent=0
    _
  %s8 = ssub.s32 1, %s6
  %s9 = scalar_select 0, %s8, %s6
  $region1: #{tpu_custom_call.1} parent=0
    #allocation6 [shape = 'u8[8192]{0}', space=vmem, size = 0x2000, scoped, tag = 'output window, operand 0']
    #allocation7 [shape = 's32[2]{0}', space=sflag, size = 0x8, scoped, tag = 'scoped memory for tpu_custom_call.1']
    %10 = vsyncpa [#allocation7], 0
    %s11 = scalar_lea.sflag [#allocation7], 1
    %12 = vsyncpa %s11, 0
    loop: start=0, step=1, limit=4
    $region2: #{tpu_custom_call.1} parent=1 // loop_pre_header
      _
    $region3: #{tpu_custom_call.1} parent=1 // loop_header
      %s14 = sphi 0, %s18
      %p15 = scmp.ge.s32.totalorder %s14, 4
      %s21 = sphi 0, %s33
      %s22 = sphi 0, %s29
      %s23 = sphi 0, %s21
      %s24 = sphi 0, %s22
      %s25 = sphi 0, %s23
      %s26 = sphi 0, %s24
      %s34 = sphi 0, %s34
      %s36 = sphi 0, %s34
      %s37 = sphi 0, %s36
      %s51 = sphi 0, %s37
      %s55 = sphi 0, %s55
      %s57 = sphi 0, %s55
      %s58 = sphi 0, %s57
      %s72 = sphi 0, %s58
      %s76 = sphi 0, %s76
      %s78 = sphi 0, %s76
      %s79 = sphi 0, %s78
      %s93 = sphi 0, %s79
      %s125 = sphi 0, %s127
      %s128 = sphi 0, %s125
      %s129 = sphi 0, %s128
      %s145 = sphi 0, %s129
      %s177 = sphi 0, %s179
      %s180 = sphi 0, %s177
      %s181 = sphi 0, %s180
      %s197 = sphi 0, %s181
      %s203 = sphi 0, %s205
      %s206 = sphi 0, %s203
      %s207 = sphi 0, %s206
      %s223 = sphi 0, %s207
    $region4: #{tpu_custom_call.1} parent=1 // loop_header_branch
      %17 = sbr.rel (%p15) target = $region8
    $region5: #{tpu_custom_call.1} parent=1 // loop_body
      %s19 = ssub.s32 %s14, 1
      %s20 = ssub.s32 %s14, 2
      %s27 = sadd.s32 1, %s22
      %p28 = scmp.ge.s32.totalorder %s27, 1
      %s29 = scalar_select %p28, 0, %s27
      %s30 = sadd.s32 1, %s21
      %s31 = scalar_select %p28, %s30, %s21
      %p32 = scmp.ge.s32.totalorder %s31, 2
      %s33 = scalar_select %p32, 0, %s31
      %s35 = sadd.s32 %s34, 1
      %p38 = scmp.eq.s32.totalorder %s14, 1
      %p39 = scmp.ne.s32.totalorder %s34, %s36
      %p40 = scmp.eq.s32.totalorder %s14, 0
      %p41 = por %p39, %p40
      %p42 = scmp.ne.s32.totalorder %s34, %s36
      %p43 = scmp.eq.s32.totalorder %s19, 1
      %p44 = por %p42, %p43
      %p45 = scmp.ne.s32.totalorder %s36, %s37
      %p46 = scmp.eq.s32.totalorder %s19, 0
      %p47 = por %p45, %p46
      %p48 = scmp.ne.s32.totalorder %s36, %s37
      %p49 = scmp.eq.s32.totalorder %s20, 1
      %p50 = por %p48, %p49
      %p52 = scmp.ne.s32.totalorder %s37, %s51
      %p53 = scmp.eq.s32.totalorder %s20, 0
      %p54 = por %p52, %p53
      %s56 = sadd.s32 %s55, 1
      %p59 = scmp.eq.s32.totalorder %s14, 1
      %p60 = scmp.ne.s32.totalorder %s55, %s57
      %p61 = scmp.eq.s32.totalorder %s14, 0
      %p62 = por %p60, %p61
      %p63 = scmp.ne.s32.totalorder %s55, %s57
      %p64 = scmp.eq.s32.totalorder %s19, 1
      %p65 = por %p63, %p64
      %p66 = scmp.ne.s32.totalorder %s57, %s58
      %p67 = scmp.eq.s32.totalorder %s19, 0
      %p68 = por %p66, %p67
      %p69 = scmp.ne.s32.totalorder %s57, %s58
      %p70 = scmp.eq.s32.totalorder %s20, 1
      %p71 = por %p69, %p70
      %p73 = scmp.ne.s32.totalorder %s58, %s72
      %p74 = scmp.eq.s32.totalorder %s20, 0
      %p75 = por %p73, %p74
      %s77 = sadd.s32 %s76, 1
      %p80 = scmp.eq.s32.totalorder %s14, 1
      %p81 = scmp.ne.s32.totalorder %s76, %s78
      %p82 = scmp.eq.s32.totalorder %s14, 0
      %p83 = por %p81, %p82
      %p84 = scmp.ne.s32.totalorder %s76, %s78
      %p85 = scmp.eq.s32.totalorder %s19, 1
      %p86 = por %p84, %p85
      %p87 = scmp.ne.s32.totalorder %s78, %s79
      %p88 = scmp.eq.s32.totalorder %s19, 0
      %p89 = por %p87, %p88
      %p90 = scmp.ne.s32.totalorder %s78, %s79
      %p91 = scmp.eq.s32.totalorder %s20, 1
      %p92 = por %p90, %p91
      %p94 = scmp.ne.s32.totalorder %s79, %s93
      %p95 = scmp.eq.s32.totalorder %s20, 0
      %p96 = por %p94, %p95
      %s97 = sadd.s32 %s21, %s22
      %p98 = scmp.lt.s32.totalorder %s97, 0
      %s99 = ssub.s32 0, %s97
      %s100 = scalar_select %p98, %s99, %s97
      %s101 = sand.u32 %s100, 1
      %s102 = ssub.s32 0, %s101
      %s103 = scalar_select %p98, %s102, %s101
      %p104 = scmp.ne.s32.totalorder %s103, 0
      %p105 = scmp.lt.s32.totalorder %s103, 0
      %p106 = pnand %p105, %p104
      %p107 = pneg %p106
      %s108 = sadd.s32 %s103, 2
      %s109 = scalar_select %p107, %s108, %s103
      %s110 = sadd.s32 %s33, %s29
      %p111 = scmp.lt.s32.totalorder %s110, 0
      %s112 = ssub.s32 0, %s110
      %s113 = scalar_select %p111, %s112, %s110
      %s114 = sand.u32 %s113, 1
      %s115 = ssub.s32 0, %s114
      %s116 = scalar_select %p111, %s115, %s114
      %p117 = scmp.ne.s32.totalorder %s116, 0
      %p118 = scmp.lt.s32.totalorder %s116, 0
      %p119 = pnand %p118, %p117
      %p120 = pneg %p119
      %s121 = sadd.s32 %s116, 2
      %s122 = scalar_select %p120, %s121, %s116
      %s123 = ssub.s32 %s109, %s122
      %p124 = scmp.eq.s32.totalorder %s123, 0
      %s126 = sadd.s32 %s125, 1
      %s127 = scalar_select %p124, %s125, %s126
      %p130 = pneg %p124
      %p131 = scmp.eq.s32.totalorder %s14, 1
      %p132 = por %p130, %p131
      %p133 = scmp.ne.s32.totalorder %s125, %s128
      %p134 = scmp.eq.s32.totalorder %s14, 0
      %p135 = por %p133, %p134
      %p136 = scmp.ne.s32.totalorder %s125, %s128
      %p137 = scmp.eq.s32.totalorder %s19, 1
      %p138 = por %p136, %p137
      %p139 = scmp.ne.s32.totalorder %s128, %s129
      %p140 = scmp.eq.s32.totalorder %s19, 0
      %p141 = por %p139, %p140
      %p142 = scmp.ne.s32.totalorder %s128, %s129
      %p143 = scmp.eq.s32.totalorder %s20, 1
      %p144 = por %p142, %p143
      %p146 = scmp.ne.s32.totalorder %s129, %s145
      %p147 = scmp.eq.s32.totalorder %s20, 0
      %p148 = por %p146, %p147
      %s149 = sadd.s32 %s21, %s22
      %p150 = scmp.lt.s32.totalorder %s149, 0
      %s151 = ssub.s32 0, %s149
      %s152 = scalar_select %p150, %s151, %s149
      %s153 = sand.u32 %s152, 1
      %s154 = ssub.s32 0, %s153
      %s155 = scalar_select %p150, %s154, %s153
      %p156 = scmp.ne.s32.totalorder %s155, 0
      %p157 = scmp.lt.s32.totalorder %s155, 0
      %p158 = pnand %p157, %p156
      %p159 = pneg %p158
      %s160 = sadd.s32 %s155, 2
      %s161 = scalar_select %p159, %s160, %s155
      %s162 = sadd.s32 %s33, %s29
      %p163 = scmp.lt.s32.totalorder %s162, 0
      %s164 = ssub.s32 0, %s162
      %s165 = scalar_select %p163, %s164, %s162
      %s166 = sand.u32 %s165, 1
      %s167 = ssub.s32 0, %s166
      %s168 = scalar_select %p163, %s167, %s166
      %p169 = scmp.ne.s32.totalorder %s168, 0
      %p170 = scmp.lt.s32.totalorder %s168, 0
      %p171 = pnand %p170, %p169
      %p172 = pneg %p171
      %s173 = sadd.s32 %s168, 2
      %s174 = scalar_select %p172, %s173, %s168
      %s175 = ssub.s32 %s161, %s174
      %p176 = scmp.eq.s32.totalorder %s175, 0
      %s178 = sadd.s32 %s177, 1
      %s179 = scalar_select %p176, %s177, %s178
      %p182 = pneg %p176
      %p183 = scmp.eq.s32.totalorder %s14, 1
      %p184 = por %p182, %p183
      %p185 = scmp.ne.s32.totalorder %s177, %s180
      %p186 = scmp.eq.s32.totalorder %s14, 0
      %p187 = por %p185, %p186
      %p188 = scmp.ne.s32.totalorder %s177, %s180
      %p189 = scmp.eq.s32.totalorder %s19, 1
      %p190 = por %p188, %p189
      %p191 = scmp.ne.s32.totalorder %s180, %s181
      %p192 = scmp.eq.s32.totalorder %s19, 0
      %p193 = por %p191, %p192
      %p194 = scmp.ne.s32.totalorder %s180, %s181
      %p195 = scmp.eq.s32.totalorder %s20, 1
      %p196 = por %p194, %p195
      %p198 = scmp.ne.s32.totalorder %s181, %s197
      %p199 = scmp.eq.s32.totalorder %s20, 0
      %p200 = por %p198, %p199
      %s201 = ssub.s32 %s21, %s33
      %p202 = scmp.eq.s32.totalorder %s201, 0
      %s204 = sadd.s32 %s203, 1
      %s205 = scalar_select %p202, %s203, %s204
      %p208 = pneg %p202
      %p209 = scmp.eq.s32.totalorder %s14, 1
      %p210 = por %p208, %p209
      %p211 = scmp.ne.s32.totalorder %s203, %s206
      %p212 = scmp.eq.s32.totalorder %s14, 0
      %p213 = por %p211, %p212
      %p214 = scmp.ne.s32.totalorder %s203, %s206
      %p215 = scmp.eq.s32.totalorder %s19, 1
      %p216 = por %p214, %p215
      %p217 = scmp.ne.s32.totalorder %s206, %s207
      %p218 = scmp.eq.s32.totalorder %s19, 0
      %p219 = por %p217, %p218
      %p220 = scmp.ne.s32.totalorder %s206, %s207
      %p221 = scmp.eq.s32.totalorder %s20, 1
      %p222 = por %p220, %p221
      %p224 = scmp.ne.s32.totalorder %s207, %s223
      %p225 = scmp.eq.s32.totalorder %s20, 0
      %p226 = por %p224, %p225
      %p227 = scmp.le.s32.totalorder 1, %s14
      %p228 = scmp.lt.s32.totalorder %s14, 3
      %p229 = pnand %p227, %p228
      %p230 = pneg %p229
      // Predicated region
      $region9: #{tpu_custom_call.1} parent=5 // pred_check
        _
      $region10: #{tpu_custom_call.1} parent=5 // pred_check_branch
        %232 = sbr.rel (%p229) target = $region12
      $region11: #{tpu_custom_call.1} parent=5 // pred_region
        %s233 = ssub.s32 %s14, 1
        // Predicated region
        $region13: #{tpu_custom_call.1} parent=11 // pred_check
          %p234 = pneg %p47
        $region14: #{tpu_custom_call.1} parent=11 // pred_check_branch
          %236 = sbr.rel (%p234) target = $region16
        $region15: #{tpu_custom_call.1} parent=11 // pred_region
          _
        $region16: #{tpu_custom_call.1} parent=11 // pred_fallthru
          _
        // Predicated region
        $region17: #{tpu_custom_call.1} parent=11 // pred_check
          %p237 = pneg %p68
        $region18: #{tpu_custom_call.1} parent=11 // pred_check_branch
          %239 = sbr.rel (%p237) target = $region20
        $region19: #{tpu_custom_call.1} parent=11 // pred_region
          _
        $region20: #{tpu_custom_call.1} parent=11 // pred_fallthru
          _
        // Predicated region
        $region21: #{tpu_custom_call.1} parent=11 // pred_check
          %p240 = pneg %p89
        $region22: #{tpu_custom_call.1} parent=11 // pred_check_branch
          %242 = sbr.rel (%p240) target = $region24
        $region23: #{tpu_custom_call.1} parent=11 // pred_region
          _
        $region24: #{tpu_custom_call.1} parent=11 // pred_fallthru
          _
      $region12: #{tpu_custom_call.1} parent=5 // pred_fallthru
        _
      %p243 = scmp.lt.s32.totalorder %s14, 2
      // Predicated region
      $region25: #{tpu_custom_call.1} parent=5 // pred_check
        %p244 = pneg %p243
      $region26: #{tpu_custom_call.1} parent=5 // pred_check_branch
        %246 = sbr.rel (%p244) target = $region28
      $region27: #{tpu_custom_call.1} parent=5 // pred_region
        // Predicated region
        $region29: #{tpu_custom_call.1} parent=27 // pred_check
          %p247 = pneg %p135
        $region30: #{tpu_custom_call.1} parent=27 // pred_check_branch
          %249 = sbr.rel (%p247) target = $region32
        $region31: #{tpu_custom_call.1} parent=27 // pred_region
          %s250 = sadd.s32 %s21, %s22
          %p251 = scmp.lt.s32.totalorder %s250, 0
          %s252 = ssub.s32 0, %s250
          %s253 = scalar_select %p251, %s252, %s250
          %s254 = sand.u32 %s253, 1
          %s255 = ssub.s32 0, %s254
          %s256 = scalar_select %p251, %s255, %s254
          %p257 = scmp.ne.s32.totalorder %s256, 0
          %p258 = scmp.lt.s32.totalorder %s256, 0
          %p259 = pnand %p258, %p257
          %p260 = pneg %p259
          %s261 = sadd.s32 %s256, 2
          %s262 = scalar_select %p260, %s261, %s256
          %p263 = scmp.lt.s32.totalorder %s262, 1
          %s264 = scalar_select %p263, %s262, 1
          %s265 = smul.addr %s264, 8
          %s266 = scalar_lea.vmem %s3, %s265
          %s267 = sadd.s32 %s21, %s22
          %p268 = scmp.lt.s32.totalorder %s267, 0
          %s269 = ssub.s32 0, %s267
          %s270 = scalar_select %p268, %s269, %s267
          %s271 = sand.u32 %s270, 1
          %s272 = ssub.s32 0, %s271
          %s273 = scalar_select %p268, %s272, %s271
          %p274 = scmp.ne.s32.totalorder %s273, 0
          %p275 = scmp.lt.s32.totalorder %s273, 0
          %p276 = pnand %p275, %p274
          %p277 = pneg %p276
          %s278 = sadd.s32 %s273, 2
          %s279 = scalar_select %p277, %s278, %s273
        $region32: #{tpu_custom_call.1} parent=27 // pred_fallthru
          _
        // Predicated region
        $region33: #{tpu_custom_call.1} parent=27 // pred_check
          %p280 = pneg %p187
        $region34: #{tpu_custom_call.1} parent=27 // pred_check_branch
          %282 = sbr.rel (%p280) target = $region36
        $region35: #{tpu_custom_call.1} parent=27 // pred_region
          %s283 = sadd.s32 %s21, %s22
          %p284 = scmp.lt.s32.totalorder %s283, 0
          %s285 = ssub.s32 0, %s283
          %s286 = scalar_select %p284, %s285, %s283
          %s287 = sand.u32 %s286, 1
          %s288 = ssub.s32 0, %s287
          %s289 = scalar_select %p284, %s288, %s287
          %p290 = scmp.ne.s32.totalorder %s289, 0
          %p291 = scmp.lt.s32.totalorder %s289, 0
          %p292 = pnand %p291, %p290
          %p293 = pneg %p292
          %s294 = sadd.s32 %s289, 2
          %s295 = scalar_select %p293, %s294, %s289
          %p296 = scmp.lt.s32.totalorder %s295, 1
          %s297 = scalar_select %p296, %s295, 1
          %s298 = smul.addr %s297, 8
          %s299 = scalar_lea.vmem %s4, %s298
          %s300 = sadd.s32 %s21, %s22
          %p301 = scmp.lt.s32.totalorder %s300, 0
          %s302 = ssub.s32 0, %s300
          %s303 = scalar_select %p301, %s302, %s300
          %s304 = sand.u32 %s303, 1
          %s305 = ssub.s32 0, %s304
          %s306 = scalar_select %p301, %s305, %s304
          %p307 = scmp.ne.s32.totalorder %s306, 0
          %p308 = scmp.lt.s32.totalorder %s306, 0
          %p309 = pnand %p308, %p307
          %p310 = pneg %p309
          %s311 = sadd.s32 %s306, 2
          %s312 = scalar_select %p310, %s311, %s306
        $region36: #{tpu_custom_call.1} parent=27 // pred_fallthru
          _
      $region28: #{tpu_custom_call.1} parent=5 // pred_fallthru
        _
      %p313 = scmp.le.s32.totalorder 1, %s14
      %p314 = scmp.lt.s32.totalorder %s14, 3
      %p315 = pnand %p313, %p314
      %p316 = pneg %p315
      // Predicated region
      $region37: #{tpu_custom_call.1} parent=5 // pred_check
        _
      $region38: #{tpu_custom_call.1} parent=5 // pred_check_branch
        %318 = sbr.rel (%p315) target = $region40
      $region39: #{tpu_custom_call.1} parent=5 // pred_region
        %s319 = ssub.s32 %s14, 1
        %p320 = pneg %p47
        %p321 = pneg %p44
        %p322 = pneg %p68
        %p323 = pneg %p65
        %p324 = pneg %p89
        %p325 = pneg %p86
        %s326 = sadd.s32 %s23, %s24
        %p327 = scmp.lt.s32.totalorder %s326, 0
        %s328 = ssub.s32 0, %s326
        %s329 = scalar_select %p327, %s328, %s326
        %s330 = sand.u32 %s329, 1
        %s331 = ssub.s32 0, %s330
        %s332 = scalar_select %p327, %s331, %s330
        %p333 = scmp.ne.s32.totalorder %s332, 0
        %p334 = scmp.lt.s32.totalorder %s332, 0
        %p335 = pnand %p334, %p333
        %p336 = pneg %p335
        %s337 = sadd.s32 %s332, 2
        %s338 = scalar_select %p336, %s337, %s332
        %p339 = scmp.lt.s32.totalorder %s338, 1
        %s340 = scalar_select %p339, %s338, 1
        %s341 = smul.addr %s340, 8
        %s342 = scalar_lea.vmem %s3, %s341
        %p343 = pneg %p141
        %p344 = pneg %p138
        %s345 = sadd.s32 %s23, %s24
        %p346 = scmp.lt.s32.totalorder %s345, 0
        %s347 = ssub.s32 0, %s345
        %s348 = scalar_select %p346, %s347, %s345
        %s349 = sand.u32 %s348, 1
        %s350 = ssub.s32 0, %s349
        %s351 = scalar_select %p346, %s350, %s349
        %p352 = scmp.ne.s32.totalorder %s351, 0
        %p353 = scmp.lt.s32.totalorder %s351, 0
        %p354 = pnand %p353, %p352
        %p355 = pneg %p354
        %s356 = sadd.s32 %s351, 2
        %s357 = scalar_select %p355, %s356, %s351
        %p358 = scmp.lt.s32.totalorder %s357, 1
        %s359 = scalar_select %p358, %s357, 1
        %s360 = smul.addr %s359, 8
        %s361 = scalar_lea.vmem %s4, %s360
        %p362 = pneg %p193
        %p363 = pneg %p190
        %p364 = pneg %p219
        %p365 = pneg %p216
        %s366 = sand.u32 %s206, 1
        %s367 = scalar_lea.sflag [#allocation7], %s366
        %s368 = sand.u32 %s206, 1
        %s369 = smul.addr %s368, 8
        %s370 = scalar_lea.vmem [#allocation6], %s369
        %s371 = sadd.s32 %s23, %s24
        %p372 = scmp.lt.s32.totalorder %s371, 0
        %s373 = ssub.s32 0, %s371
        %s374 = scalar_select %p372, %s373, %s371
        %s375 = sand.u32 %s374, 1
        %s376 = ssub.s32 0, %s375
        %s377 = scalar_select %p372, %s376, %s375
        %p378 = scmp.ne.s32.totalorder %s377, 0
        %p379 = scmp.lt.s32.totalorder %s377, 0
        %p380 = pnand %p379, %p378
        %p381 = pneg %p380
        %s382 = sadd.s32 %s377, 2
        %s383 = scalar_select %p381, %s382, %s377
        %p384 = scmp.lt.s32.totalorder %s383, 1
        %s385 = scalar_select %p384, %s383, 1
        %s386 = smul.addr %s385, 8
        %s387 = scalar_lea.vmem %s3, %s386
        %s388 = sadd.s32 %s23, %s24
        %p389 = scmp.lt.s32.totalorder %s388, 0
        %s390 = ssub.s32 0, %s388
        %s391 = scalar_select %p389, %s390, %s388
        %s392 = sand.u32 %s391, 1
        %s393 = ssub.s32 0, %s392
        %s394 = scalar_select %p389, %s393, %s392
        %p395 = scmp.ne.s32.totalorder %s394, 0
        %p396 = scmp.lt.s32.totalorder %s394, 0
        %p397 = pnand %p396, %p395
        %p398 = pneg %p397
        %s399 = sadd.s32 %s394, 2
        %s400 = scalar_select %p398, %s399, %s394
        %s401 = sadd.s32 %s23, %s24
        %p402 = scmp.lt.s32.totalorder %s401, 0
        %s403 = ssub.s32 0, %s401
        %s404 = scalar_select %p402, %s403, %s401
        %s405 = sand.u32 %s404, 1
        %s406 = ssub.s32 0, %s405
        %s407 = scalar_select %p402, %s406, %s405
        %p408 = scmp.ne.s32.totalorder %s407, 0
        %p409 = scmp.lt.s32.totalorder %s407, 0
        %p410 = pnand %p409, %p408
        %p411 = pneg %p410
        %s412 = sadd.s32 %s407, 2
        %s413 = scalar_select %p411, %s412, %s407
        %p414 = scmp.lt.s32.totalorder %s413, 1
        %s415 = scalar_select %p414, %s413, 1
        %s416 = smul.addr %s415, 8
        %s417 = scalar_lea.vmem %s4, %s416
        %s418 = sadd.s32 %s23, %s24
        %p419 = scmp.lt.s32.totalorder %s418, 0
        %s420 = ssub.s32 0, %s418
        %s421 = scalar_select %p419, %s420, %s418
        %s422 = sand.u32 %s421, 1
        %s423 = ssub.s32 0, %s422
        %s424 = scalar_select %p419, %s423, %s422
        %p425 = scmp.ne.s32.totalorder %s424, 0
        %p426 = scmp.lt.s32.totalorder %s424, 0
        %p427 = pnand %p426, %p425
        %p428 = pneg %p427
        %s429 = sadd.s32 %s424, 2
        %s430 = scalar_select %p428, %s429, %s424
        %p431 = scmp.eq.s32.totalorder %s24, 0
        // Predicated region
        $region41: #{tpu_custom_call.1} parent=39 // pred_check
          %p432 = pneg %p431
        $region42: #{tpu_custom_call.1} parent=39 // pred_check_branch
          %434 = sbr.rel (%p432) target = $region44
        $region43: #{tpu_custom_call.1} parent=39 // pred_region
          %vm435 = vcmask 0
          %436 = vst.msk [vmem:[#allocation2] sm:$0x1] %vm435, 0.0
          %437 = vst.msk [vmem:[#allocation3] sm:$0x1] %vm435, 0.0
          %438 = vst.msk [vmem:[#allocation4] sm:$0x1] %vm435, 0.0
          %439 = vst.msk [vmem:[#allocation5] sm:$0x1] %vm435, 0.0
        $region44: #{tpu_custom_call.1} parent=39 // pred_fallthru
          _
        %p440 = scmp.eq.s32.totalorder %s23, 0
        %p441 = pnand %p440, %p431
        %p442 = pneg %p441
        // Predicated region
        $region45: #{tpu_custom_call.1} parent=39 // pred_check
          _
        $region46: #{tpu_custom_call.1} parent=39 // pred_check_branch
          %444 = sbr.rel (%p441) target = $region48
        $region47: #{tpu_custom_call.1} parent=39 // pred_region
          %v445 = vld [vmem:[%s2] sm:$0xff]
          %v446 = vlaneseq
          %v447 = vand.u32 %v446, 127
          %448 = vset.pattern.permute.xlu0 0
          %449 = vperm.xlu0 %448, %v445
          %v450 = vpop.permute.xlu0 %449
          %vm451 = vcmp.eq.s32.totalorder %v447, %v450
          %v452 = vsel %vm451, 1, 0
          %v453 = vcvt.s32.f32 %v452
          %v454 = vld [vmem:[%s0] sm:$0xff]
          %v455 = vadd.f32 %v454, 1e-06
          %vm456 = vcmask 31744
          %v457 = vsel %vm456, %v455, -inf
          %458 = vmax.xlane.f32.xlu0 %v457
          %v459 = vpop.xlane.xlu0 %458
          %v460 = vsub.f32 %v455, %v459
          %v461 = vmul.f32 %v460, 1.442695
          %v462 = vpow.pop %v461
          %v463 = vsel %vm456, %v462, 0.0
          %464 = vadd.xlane.f32.xlu0 %v463
          %v465 = vpop.xlane.xlu0 %464
          %v466 = vlog2.pop %v465
          %v467 = vmul.f32 %v466, 0.6931472
          %v468 = vsub.f32 %v460, %v467
          %v469 = vmul.f32 %v453, %v468
          %v470 = vsel %vm456, %v469, 0.0
          %471 = vadd.xlane.f32.xlu0 %v470
          %v472 = vpop.xlane.xlu0 %471
          %v473 = vsub.f32 0.0, %v472
          %v474 = vrot.slane %v473, 4
          %v475 = vadd.f32 %v473, %v474
          %v476 = vrot.slane %v475, 2
          %v477 = vadd.f32 %v475, %v476
          %v478 = vrot.slane %v477, 1
          %v479 = vadd.f32 %v477, %v478
          %v480 = vmul.f32 %v479, 0.125
          %vm481 = vcmask 0
          %482 = vst.msk [vmem:[#allocation4] sm:$0x1] %vm481, %v480
          %v483 = vld [vmem:[%s1] sm:$0xff]
          %v484 = vadd.f32 %v483, 1e-06
          %v485 = vsel %vm456, %v484, -inf
          %486 = vmax.xlane.f32.xlu0 %v485
          %v487 = vpop.xlane.xlu0 %486
          %v488 = vsub.f32 %v484, %v487
          %v489 = vmul.f32 %v488, 1.442695
          %v490 = vpow.pop %v489
          %v491 = vsel %vm456, %v490, 0.0
          %492 = vadd.xlane.f32.xlu0 %v491
          %v493 = vpop.xlane.xlu0 %492
          %v494 = vlog2.pop %v493
          %v495 = vmul.f32 %v494, 0.6931472
          %v496 = vsub.f32 %v488, %v495
          %v497 = vmul.f32 %v453, %v496
          %v498 = vsel %vm456, %v497, 0.0
          %499 = vadd.xlane.f32.xlu0 %v498
          %v500 = vpop.xlane.xlu0 %499
          %v501 = vsub.f32 0.0, %v500
          %v502 = vrot.slane %v501, 4
          %v503 = vadd.f32 %v501, %v502
          %v504 = vrot.slane %v503, 2
          %v505 = vadd.f32 %v503, %v504
          %v506 = vrot.slane %v505, 1
          %v507 = vadd.f32 %v505, %v506
          %v508 = vmul.f32 %v507, 0.125
          %509 = vst.msk [vmem:[#allocation5] sm:$0x1] %vm481, %v508
        $region48: #{tpu_custom_call.1} parent=39 // pred_fallthru
          _
        %v510 = vld [vmem:[%s417] sm:$0xff]
        %v511 = vld [vmem:[%s387] sm:$0xff]
        %v512 = vsub.f32 %v511, %v510
        %v513 = vand.u32 2147483647, %v512
        %vm514 = vcmask 261120
        %v515 = vsel %vm514, %v510, 0.0
        %516 = vadd.xlane.f32.xlu0 %v515
        %v517 = vpop.xlane.xlu0 %516
        %v518 = vsel %vm514, %v513, 0.0
        %519 = vadd.xlane.f32.xlu0 %v518
        %v520 = vpop.xlane.xlu0 %519
        %vm521 = vcmp.ne.f32.partialorder %v517, 0.0
        %v522 = vsel %vm521, 1, 0
        %v523 = vcvt.s32.f32 %v522
        %v524 = vmul.f32 %v520, %v523
        %v525 = vrot.slane %v524, 4
        %v526 = vadd.f32 %v524, %v525
        %v527 = vrot.slane %v526, 2
        %v528 = vadd.f32 %v526, %v527
        %v529 = vrot.slane %v528, 1
        %v530 = vadd.f32 %v528, %v529
        %v531 = vadd.f32 %v530, 0.0
        %v532 = vrot.slane %v523, 4
        %v533 = vadd.f32 %v523, %v532
        %v534 = vrot.slane %v533, 2
        %v535 = vadd.f32 %v533, %v534
        %v536 = vrot.slane %v535, 1
        %v537 = vadd.f32 %v535, %v536
        %v538 = vadd.f32 %v537, 0.0
        %540 = vrot.lane.b32.xlu0 %v510, 96
        %v541 = vpop.permute.xlu0 %540
        %v543 = vsel %vm514, %v541, 0.0
        %544 = vadd.xlane.f32.xlu0 %v543
        %v545 = vpop.xlane.xlu0 %544
        %547 = vrot.lane.b32.xlu0 %v513, 96
        %v548 = vpop.permute.xlu0 %547
        %v550 = vsel %vm514, %v548, 0.0
        %551 = vadd.xlane.f32.xlu0 %v550
        %v552 = vpop.xlane.xlu0 %551
        %vm553 = vcmp.ne.f32.partialorder %v545, 0.0
        %v554 = vsel %vm553, 1, 0
        %v555 = vcvt.s32.f32 %v554
        %v556 = vmul.f32 %v552, %v555
        %v557 = vrot.slane %v556, 4
        %v558 = vadd.f32 %v556, %v557
        %v559 = vrot.slane %v558, 2
        %v560 = vadd.f32 %v558, %v559
        %v561 = vrot.slane %v560, 1
        %v562 = vadd.f32 %v560, %v561
        %v563 = vadd.f32 %v531, %v562
        %v564 = vrot.slane %v555, 4
        %v565 = vadd.f32 %v555, %v564
        %v566 = vrot.slane %v565, 2
        %v567 = vadd.f32 %v565, %v566
        %v568 = vrot.slane %v567, 1
        %v569 = vadd.f32 %v567, %v568
        %v570 = vadd.f32 %v538, %v569
        %571 = vrot.lane.b32.xlu0 %v510, 64
        %v572 = vpop.permute.xlu0 %571
        %v574 = vsel %vm514, %v572, 0.0
        %575 = vadd.xlane.f32.xlu0 %v574
        %v576 = vpop.xlane.xlu0 %575
        %577 = vrot.lane.b32.xlu0 %v513, 64
        %v578 = vpop.permute.xlu0 %577
        %v580 = vsel %vm514, %v578, 0.0
        %581 = vadd.xlane.f32.xlu0 %v580
        %v582 = vpop.xlane.xlu0 %581
        %vm583 = vcmp.ne.f32.partialorder %v576, 0.0
        %v584 = vsel %vm583, 1, 0
        %v585 = vcvt.s32.f32 %v584
        %v586 = vmul.f32 %v582, %v585
        %v587 = vrot.slane %v586, 4
        %v588 = vadd.f32 %v586, %v587
        %v589 = vrot.slane %v588, 2
        %v590 = vadd.f32 %v588, %v589
        %v591 = vrot.slane %v590, 1
        %v592 = vadd.f32 %v590, %v591
        %v593 = vadd.f32 %v563, %v592
        %v594 = vrot.slane %v585, 4
        %v595 = vadd.f32 %v585, %v594
        %v596 = vrot.slane %v595, 2
        %v597 = vadd.f32 %v595, %v596
        %v598 = vrot.slane %v597, 1
        %v599 = vadd.f32 %v597, %v598
        %v600 = vadd.f32 %v570, %v599
        %601 = vrot.lane.b32.xlu0 %v510, 32
        %v602 = vpop.permute.xlu0 %601
        %v604 = vsel %vm514, %v602, 0.0
        %605 = vadd.xlane.f32.xlu0 %v604
        %v606 = vpop.xlane.xlu0 %605
        %607 = vrot.lane.b32.xlu0 %v513, 32
        %v608 = vpop.permute.xlu0 %607
        %v610 = vsel %vm514, %v608, 0.0
        %611 = vadd.xlane.f32.xlu0 %v610
        %v612 = vpop.xlane.xlu0 %611
        %vm613 = vcmp.ne.f32.partialorder %v606, 0.0
        %v614 = vsel %vm613, 1, 0
        %v615 = vcvt.s32.f32 %v614
        %v616 = vmul.f32 %v612, %v615
        %v617 = vrot.slane %v616, 4
        %v618 = vadd.f32 %v616, %v617
        %v619 = vrot.slane %v618, 2
        %v620 = vadd.f32 %v618, %v619
        %v621 = vrot.slane %v620, 1
        %v622 = vadd.f32 %v620, %v621
        %v623 = vadd.f32 %v593, %v622
        %v624 = vrot.slane %v615, 4
        %v625 = vadd.f32 %v615, %v624
        %v626 = vrot.slane %v625, 2
        %v627 = vadd.f32 %v625, %v626
        %v628 = vrot.slane %v627, 1
        %v629 = vadd.f32 %v627, %v628
        %v630 = vadd.f32 %v600, %v629
        %v631 = vld [vmem:[#allocation2] sm:$0x1]
        %v632 = vadd.f32 %v631, %v623
        %vm633 = vcmask 0
        %634 = vst.msk [vmem:[#allocation2] sm:$0x1] %vm633, %v632
        %v635 = vld [vmem:[#allocation3] sm:$0x1]
        %v636 = vadd.f32 %v635, %v630
        %637 = vst.msk [vmem:[#allocation3] sm:$0x1] %vm633, %v636
        // Predicated region
        $region49: #{tpu_custom_call.1} parent=39 // pred_check
          %p638 = pneg %p431
        $region50: #{tpu_custom_call.1} parent=39 // pred_check_branch
          %640 = sbr.rel (%p638) target = $region52
        $region51: #{tpu_custom_call.1} parent=39 // pred_region
          %v641 = vlaneseq
          %v642 = vshrl.u32 %v641, 7
          %v643 = vlaneseq
          %v644 = vand.u32 %v643, 127
          %vm645 = vcmp.eq.s32.totalorder %v642, 0
          %vm646 = vcmp.eq.s32.totalorder %v644, 0
          %vm647 = vmand %vm645, %vm646
          %v648 = vld [vmem:[#allocation2] sm:$0x1]
          %v650 = vlaneseq
          %v651 = vshrl.u32 %v650, 7
          %v652 = vsub.s32 0, %v651
          %v653 = vrot.slane %v648, %v652
          %654 = vset.pattern.permute.xlu0 0
          %655 = vperm.xlu0 %654, %v653
          %v656 = vpop.permute.xlu0 %655
          %v658 = vsel %vm647, %v656, 0.0
          %vm659 = vcmp.eq.s32.totalorder %v644, 1
          %vm660 = vmand %vm645, %vm659
          %v661 = vld [vmem:[#allocation3] sm:$0x1]
          %v663 = vlaneseq
          %v664 = vshrl.u32 %v663, 7
          %v665 = vsub.s32 0, %v664
          %v666 = vrot.slane %v661, %v665
          %667 = vset.pattern.permute.xlu0 0
          %668 = vperm.xlu0 %667, %v666
          %v669 = vpop.permute.xlu0 %668
          %v671 = vsel %vm660, %v669, %v658
          %vm672 = vcmp.eq.s32.totalorder %v644, 2
          %vm673 = vmand %vm645, %vm672
          %v674 = vld [vmem:[#allocation4] sm:$0x1]
          %v676 = vlaneseq
          %v677 = vshrl.u32 %v676, 7
          %v678 = vsub.s32 0, %v677
          %v679 = vrot.slane %v674, %v678
          %680 = vset.pattern.permute.xlu0 0
          %681 = vperm.xlu0 %680, %v679
          %v682 = vpop.permute.xlu0 %681
          %v684 = vsel %vm673, %v682, %v671
          %vm685 = vcmp.eq.s32.totalorder %v644, 3
          %vm686 = vmand %vm645, %vm685
          %v687 = vld [vmem:[#allocation5] sm:$0x1]
          %v689 = vlaneseq
          %v690 = vshrl.u32 %v689, 7
          %v691 = vsub.s32 0, %v690
          %v692 = vrot.slane %v687, %v691
          %693 = vset.pattern.permute.xlu0 0
          %694 = vperm.xlu0 %693, %v692
          %v695 = vpop.permute.xlu0 %694
          %v697 = vsel %vm686, %v695, %v684
          %698 = vst [vmem:[%s370] sm:$0xff] %v697
        $region52: #{tpu_custom_call.1} parent=39 // pred_fallthru
          _
        %s699 = sand.u32 %s206, 1
        %s700 = scalar_lea.sflag [#allocation7], %s699
        %s701 = sand.u32 %s206, 1
        %s702 = smul.addr %s701, 8
        %s703 = scalar_lea.vmem [#allocation6], %s702
        // Predicated region
        $region53: #{tpu_custom_call.1} parent=39 // pred_check
          %p704 = pneg %p216
        $region54: #{tpu_custom_call.1} parent=39 // pred_check_branch
          %706 = sbr.rel (%p704) target = $region56
        $region55: #{tpu_custom_call.1} parent=39 // pred_region
          %s708 = ssub.s32 128, 128
          %709 = vsyncadd %s700, %s708
          %s710 = smul.addr %s23, 128
          %s711 = scalar_lea.hbm %s5, %s710
          %s713 = sshll.u32 %s703, 4
          %s714 = int_to_ptr.vmem [resolvable:$true] %s713
          %716 = dma.vmem_to_hbm [thread:$0]  %s714, 128, %s711, %s700
        $region56: #{tpu_custom_call.1} parent=39 // pred_fallthru
          _
      $region40: #{tpu_custom_call.1} parent=5 // pred_fallthru
        _
      %p717 = scmp.le.s32.totalorder 2, %s14
      // Predicated region
      $region57: #{tpu_custom_call.1} parent=5 // pred_check
        %p718 = pneg %p717
      $region58: #{tpu_custom_call.1} parent=5 // pred_check_branch
        %720 = sbr.rel (%p718) target = $region60
      $region59: #{tpu_custom_call.1} parent=5 // pred_region
        %s721 = ssub.s32 %s14, 2
        // Predicated region
        $region61: #{tpu_custom_call.1} parent=59 // pred_check
          %p722 = pneg %p222
        $region62: #{tpu_custom_call.1} parent=59 // pred_check_branch
          %724 = sbr.rel (%p722) target = $region64
        $region63: #{tpu_custom_call.1} parent=59 // pred_region
          %s725 = sand.u32 %s207, 1
          %s726 = scalar_lea.sflag [#allocation7], %s725
          %s727 = sand.u32 %s207, 1
          %s728 = smul.addr %s727, 8
          %s729 = scalar_lea.vmem [#allocation6], %s728
          %730 = dma.done %s726, 128
        $region64: #{tpu_custom_call.1} parent=59 // pred_fallthru
          _
      $region60: #{tpu_custom_call.1} parent=5 // pred_fallthru
        _
    $region6: #{tpu_custom_call.1} parent=1 // loop_footer
      %s18 = sadd.s32 1, %s14
    $region7: #{tpu_custom_call.1} parent=1 // loop_footer_branch
      %13 = sbr.rel target = $region3
    $region8: #{tpu_custom_call.1} parent=1 // loop_exit
      _
    %731 = vsyncpa [#allocation7], 1
    %s732 = scalar_lea.sflag [#allocation7], 1
    %733 = vsyncpa %s732, 1

</llo_original>
